<compile_context>
chip_gen: v7x
topology: tpu7x:2x2x1
jax: 0.10.0
libtpu: 0.0.40
codegen_flags: <defaults>
</compile_context>

<pallas_src>
import functools

import jax
import jax.numpy as jnp
from jax.experimental import pallas as pl
from jax.experimental.pallas import tpu as pltpu

EPS = 1e-5


def _round_up(v, m):
    return (v + m - 1) // m * m


# ----------------------------- in-kernel math --------------------------------
def _erf_poly(x):
    # Abramowitz & Stegun 7.1.26 (|err| <= 1.5e-7), elementwise ops only.
    a1, a2, a3, a4, a5 = 0.254829592, -0.284496736, 1.421413741, -1.453152027, 1.061405429
    p = 0.3275911
    ax = jnp.abs(x)
    t = 1.0 / (1.0 + p * ax)
    poly = ((((a5 * t + a4) * t + a3) * t + a2) * t + a1) * t
    y = 1.0 - poly * jnp.exp(-ax * ax)
    return jnp.where(x >= 0, y, -y)


def _gelu_exact(x):
    # matches torch.nn.GELU() (erf formulation)
    return 0.5 * x * (1.0 + _erf_poly(x * 0.7071067811865475))


# ------------------- kernel 1: 1x1 Conv2d (+folded BN2d) + GELU ---------------
def _conv1x1_bn_gelu_kernel(x_ref, w_ref, b_ref, o_ref):
    # x: (1, Cin, TILE_P) ; w: (C2r, Cin) ; b: (C2r, 1) ; o: (1, C2r, TILE_P)
    y = jnp.dot(w_ref[...], x_ref[0], preferred_element_type=jnp.float32)
    y = y + b_ref[...]
    o_ref[0] = _gelu_exact(y).astype(o_ref.dtype)


def conv1x1_bn_gelu(x3, w, bias, tile_p):
    b, cin, p_pad = x3.shape
    c2r = w.shape[0]
    return pl.pallas_call(
        _conv1x1_bn_gelu_kernel,
        out_shape=jax.ShapeDtypeStruct((b, c2r, p_pad), jnp.float32),
        grid=(b, p_pad // tile_p),
        in_specs=[
            pl.BlockSpec((1, cin, tile_p), lambda i, j: (i, 0, j)),
            pl.BlockSpec((c2r, cin), lambda i, j: (0, 0)),
            pl.BlockSpec((c2r, 1), lambda i, j: (0, 0)),
        ],
        out_specs=pl.BlockSpec((1, c2r, tile_p), lambda i, j: (i, 0, j)),
        compiler_params=pltpu.CompilerParams(
            dimension_semantics=("parallel", "parallel")),
    )(x3, w, bias)


# ------------------ kernel 2: 3x3x3 Conv3d (+folded BN3d) + GELU --------------
def _conv3d_bn_gelu_kernel(p0_ref, p1_ref, p2_ref, w_ref, b_ref, o_ref, col_ref,
                           *, tile_r, n_chunks, xp, midr):
    # p{kz}: (1, 1, mid_r, PLp)  z-plane (z+kz) of the halo-padded volume, y/x flattened
    # w:     (Cout_r, 27*mid_r)  im2col weight (BN folded)
    # b:     (Cout_r, 1)
    # o:     (1, Cout_r, NVP_pad)  anchors of one output z-plane (lane-dense)
    # col:   (27*mid_r, TILE_R)    VMEM scratch im2col slab
    planes = (p0_ref, p1_ref, p2_ref)
    w = w_ref[...]
    bias = b_ref[...]
    for jj in range(n_chunks):                       # static chunk loop (small live set)
        base = jj * tile_r
        for kz in range(3):
            pr = planes[kz]
            for ky in range(3):
                for kx in range(3):
                    k = kz * 9 + ky * 3 + kx
                    off = base + ky * xp + kx        # static offset
                    col_ref[k * midr:(k + 1) * midr, :] = pr[0, 0, :, pl.ds(off, tile_r)]
        y = jnp.dot(w, col_ref[...], preferred_element_type=jnp.float32)   # K = 27*mid_r
        y = y + bias
        o_ref[0, :, pl.ds(base, tile_r)] = _gelu_exact(y).astype(o_ref.dtype)


def _plane_spec(kz, midr, plp):
    def imap(i, z):
        return (i, z + kz, 0, 0)
    return pl.BlockSpec((1, 1, midr, plp), imap)


def conv3d_bn_gelu(vflat, w, bias, *, tile_r, nvp_pad, xp, gz, midr):
    b, zp, _, plp = vflat.shape
    coutr = w.shape[0]
    n_chunks = nvp_pad // tile_r
    kern = functools.partial(_conv3d_bn_gelu_kernel, tile_r=tile_r,
                             n_chunks=n_chunks, xp=xp, midr=midr)
    return pl.pallas_call(
        kern,
        out_shape=jax.ShapeDtypeStruct((b, coutr, gz * nvp_pad), jnp.float32),
        grid=(b, gz),
        in_specs=[
            _plane_spec(0, midr, plp),               # z-halo: planes z, z+1, z+2 of the
            _plane_spec(1, midr, plp),               # z-padded volume (same array 3x)
            _plane_spec(2, midr, plp),
            pl.BlockSpec((coutr, 27 * midr), lambda i, z: (0, 0)),
            pl.BlockSpec((coutr, 1), lambda i, z: (0, 0)),
        ],
        out_specs=pl.BlockSpec((1, coutr, nvp_pad), lambda i, z: (i, 0, z)),
        scratch_shapes=[pltpu.VMEM((27 * midr, tile_r), jnp.float32)],
        compiler_params=pltpu.CompilerParams(
            dimension_semantics=("parallel", "parallel"),
            vmem_limit_bytes=48 * 1024 * 1024),
    )(vflat, vflat, vflat, w, bias)


# ------------------------------ module glue ----------------------------------
def init_params(key, in_channels, mid_channels, out_channels, grid_size):
    gz = grid_size[2]
    c2 = mid_channels * gz
    ks = jax.random.split(key, 12)
    f32 = jnp.float32
    return {
        "w1": (0.2 * jax.random.normal(ks[0], (c2, in_channels))).astype(f32),
        "b1": (0.1 * jax.random.normal(ks[1], (c2,))).astype(f32),
        "g1": (1.0 + 0.1 * jax.random.normal(ks[2], (c2,))).astype(f32),
        "be1": (0.1 * jax.random.normal(ks[3], (c2,))).astype(f32),
        "m1": (0.1 * jax.random.normal(ks[4], (c2,))).astype(f32),
        "v1": (1.0 + 0.5 * jax.random.uniform(ks[5], (c2,))).astype(f32),
        "w3": (0.1 * jax.random.normal(ks[6], (out_channels, mid_channels, 3, 3, 3))).astype(f32),
        "b3": (0.1 * jax.random.normal(ks[7], (out_channels,))).astype(f32),
        "g3": (1.0 + 0.1 * jax.random.normal(ks[8], (out_channels,))).astype(f32),
        "be3": (0.1 * jax.random.normal(ks[9], (out_channels,))).astype(f32),
        "m3": (0.1 * jax.random.normal(ks[10], (out_channels,))).astype(f32),
        "v3": (1.0 + 0.5 * jax.random.uniform(ks[11], (out_channels,))).astype(f32),
    }


def bev23d_forward(params, x, grid_size, mid_channels):
    gx, gy, gz = grid_size
    b, cin, h, w = x.shape
    assert (h, w) == (gy, gx)
    mid = mid_channels
    midr = _round_up(mid, 8)
    cout = params["w3"].shape[0]
    coutr = _round_up(cout, 8)

    # ---- fold BN2d into 1x1 conv; permute out-channels to (z, mid_r) order ----
    sc1 = params["g1"] / jnp.sqrt(params["v1"] + EPS)
    sh1 = params["be1"] - params["m1"] * sc1
    w1f = params["w1"] * sc1[:, None]                     # torch row order c = m*Z + z
    b1f = params["b1"] * sc1 + sh1
    perm = (jnp.arange(mid)[None, :] * gz + jnp.arange(gz)[:, None]).reshape(-1)
    w1p = jnp.pad(w1f[perm].reshape(gz, mid, cin),
                  ((0, 0), (0, midr - mid), (0, 0))).reshape(gz * midr, cin)
    b1p = jnp.pad(b1f[perm].reshape(gz, mid),
                  ((0, 0), (0, midr - mid))).reshape(gz * midr, 1)

    # ---- kernel 1: channels-first 1x1 conv + BN + GELU ----
    p = h * w
    tile_p = min(512, _round_up(p, 128))
    p_pad = _round_up(p, tile_p)
    x3 = x.reshape(b, cin, p)
    if p_pad != p:
        x3 = jnp.pad(x3, ((0, 0), (0, 0), (0, p_pad - p)))
    y1 = conv1x1_bn_gelu(x3, w1p, b1p, tile_p)            # (B, Z*mid_r, p_pad)

    # ---- layout for kernel 2: z-major channels reshape directly into z-planes ----
    y1 = y1[:, :, :p] if p_pad != p else y1
    v = y1.reshape(b, gz, midr, gy, gx)                   # (B, Z, mid_r, Y, X)
    vp = jnp.pad(v, ((0, 0), (1, 1), (0, 0), (1, 1), (1, 1)))   # (B, Zp, mid_r, Yp, Xp)
    zp, yp, xp = gz + 2, gy + 2, gx + 2

    nvp = gy * xp                                         # anchors per output z-plane
    tile_r = min(512, _round_up(nvp, 128))
    nvp_pad = _round_up(nvp, tile_r)
    plp = _round_up(nvp_pad + 2 * xp + 2, 128)            # flat plane length incl. halo reads
    vflat = vp.reshape(b, zp, midr, yp * xp)
    vflat = jnp.pad(vflat, ((0, 0), (0, 0), (0, 0), (0, plp - yp * xp)))

    # ---- fold BN3d into 3x3x3 conv; build (Cout_r, 27*mid_r) im2col weight ----
    sc3 = params["g3"] / jnp.sqrt(params["v3"] + EPS)
    sh3 = params["be3"] - params["m3"] * sc3
    w3f = params["w3"] * sc3[:, None, None, None, None]
    b3f = params["b3"] * sc3 + sh3
    w3m = jnp.transpose(w3f, (0, 2, 3, 4, 1))             # (Cout, kz, ky, kx, Cin)
    w3m = jnp.pad(w3m, ((0, coutr - cout), (0, 0), (0, 0), (0, 0), (0, midr - mid)))
    w3m = w3m.reshape(coutr, 27 * midr)
    b3m = jnp.pad(b3f, (0, coutr - cout)).reshape(coutr, 1)

    # ---- kernel 2: per-(b, z) plane, im2col matmul + BN + GELU ----
    out = conv3d_bn_gelu(vflat, w3m, b3m, tile_r=tile_r, nvp_pad=nvp_pad,
                         xp=xp, gz=gz, midr=midr)         # (B, Cout_r, Z*nvp_pad)
    out = out.reshape(b, coutr, gz, nvp_pad)[:, :cout, :, :nvp]
    out = out.reshape(b, cout, gz, gy, xp)[:, :, :, :, :gx]   # (B, Cout, Z, Y, X) NCDHW
    return [out]


# ------------------------------ JAX reference ---------------------------------
def reference_forward(params, x, grid_size, mid_channels):
    gx, gy, gz = grid_size
    b = x.shape[0]
    y = jnp.einsum("bchw,oc->bohw", x, params["w1"]) + params["b1"][None, :, None, None]
    y = (y - params["m1"][None, :, None, None]) / jnp.sqrt(params["v1"][None, :, None, None] + EPS)
    y = y * params["g1"][None, :, None, None] + params["be1"][None, :, None, None]
    y = jax.nn.gelu(y, approximate=False)
    y = y.reshape(b, mid_channels, gz, gy, gx)
    z = jax.lax.conv_general_dilated(
        y, params["w3"], window_strides=(1, 1, 1),
        padding=((1, 1), (1, 1), (1, 1)),
        dimension_numbers=("NCDHW", "OIDHW", "NCDHW"))
    z = z + params["b3"][None, :, None, None, None]
    z = (z - params["m3"][None, :, None, None, None]) / jnp.sqrt(
        params["v3"][None, :, None, None, None] + EPS)
    z = z * params["g3"][None, :, None, None, None] + params["be3"][None, :, None, None, None]
    z = jax.nn.gelu(z, approximate=False)
    return [z]


if __name__ == "__main__":
    B, CIN, MID, COUT = 2, 4, 4, 8
    GRID_SIZE = (8, 8, 4)          # (X, Y, Z): Z multiplies mid channels, view -> (Z, Y, X)
    GX, GY, GZ = GRID_SIZE

    key = jax.random.PRNGKey(0)
    kx_, kp = jax.random.split(key)
    x = jax.random.normal(kx_, (B, CIN, GY, GX), dtype=jnp.float32)
    params = init_params(kp, CIN, MID, COUT, GRID_SIZE)

    outs = bev23d_forward(params, x, GRID_SIZE, MID)
    out = jax.block_until_ready(outs[0])

    ref = reference_forward(params, x, GRID_SIZE, MID)[0]
    assert out.shape == (B, COUT, GZ, GY, GX), out.shape
    max_err = float(jnp.max(jnp.abs(out - ref)))
    assert max_err < 2e-4, f"max abs error {max_err}"
    print("KERNEL_OK")
</pallas_src>

<mosaic_0001>
module attributes {stable_mosaic.version = 11 : i64} {
  func.func @_conv1x1_bn_gelu_kernel(%arg0: i32, %arg1: i32, %arg2: memref<1x4x128xf32, #tpu.memory_space<vmem>>, %arg3: memref<32x4xf32, #tpu.memory_space<vmem>>, %arg4: memref<32x1xf32, #tpu.memory_space<vmem>>, %arg5: memref<1x32x128xf32, #tpu.memory_space<vmem>>) attributes {dimension_semantics = [#tpu.dimension_semantics<parallel>, #tpu.dimension_semantics<parallel>], iteration_bounds = array<i64: 2, 1>, scalar_prefetch = 0 : i64, scratch_operands = 0 : i64, tpu.core_type = #tpu.core_type<tc>, window_params = [{transform_indices = @transform_0, window_bounds = array<i64: 1, 4, 128>}, {pipeline_mode = #tpu.pipeline_mode<synchronous>, transform_indices = @transform_1, window_bounds = array<i64: 32, 4>}, {pipeline_mode = #tpu.pipeline_mode<synchronous>, transform_indices = @transform_2, window_bounds = array<i64: 32, 1>}, {transform_indices = @transform_3, window_bounds = array<i64: 1, 32, 128>}]} {
    %c0 = arith.constant 0 : index
    %c0_0 = arith.constant 0 : index
    %0 = vector.load %arg3[%c0, %c0_0] : memref<32x4xf32, #tpu.memory_space<vmem>>, vector<32x4xf32>
    %c0_1 = arith.constant 0 : index
    %c0_2 = arith.constant 0 : index
    %c0_3 = arith.constant 0 : index
    %1 = vector.load %arg2[%c0_1, %c0_2, %c0_3] : memref<1x4x128xf32, #tpu.memory_space<vmem>>, vector<1x4x128xf32>
    %2 = vector.shape_cast %1 : vector<1x4x128xf32> to vector<4x128xf32>
    %cst = arith.constant dense<0.000000e+00> : vector<32x128xf32>
    %3 = tpu.matmul %0, %2, %cst {dimension_numbers = #tpu.dot_dimension_numbers<[1], [0], [0], [1], [0, 0, 1, 1], [], []>} : vector<32x4xf32>, vector<4x128xf32>, vector<32x128xf32> -> vector<32x128xf32>
    %c0_4 = arith.constant 0 : index
    %c0_5 = arith.constant 0 : index
    %4 = vector.load %arg4[%c0_4, %c0_5] : memref<32x1xf32, #tpu.memory_space<vmem>>, vector<32x1xf32>
    %5 = vector.broadcast %4 : vector<32x1xf32> to vector<32x128xf32>
    %6 = arith.addf %3, %5 : vector<32x128xf32>
    %cst_6 = arith.constant 5.000000e-01 : f32
    %7 = vector.broadcast %cst_6 : f32 to vector<32x128xf32>
    %8 = arith.mulf %7, %6 : vector<32x128xf32>
    %cst_7 = arith.constant 0.707106769 : f32
    %9 = vector.broadcast %cst_7 : f32 to vector<32x128xf32>
    %10 = arith.mulf %6, %9 : vector<32x128xf32>
    %11 = math.absf %10 : vector<32x128xf32>
    %cst_8 = arith.constant 0.327591091 : f32
    %12 = vector.broadcast %cst_8 : f32 to vector<32x128xf32>
    %13 = arith.mulf %12, %11 : vector<32x128xf32>
    %cst_9 = arith.constant 1.000000e+00 : f32
    %14 = vector.broadcast %cst_9 : f32 to vector<32x128xf32>
    %15 = arith.addf %14, %13 : vector<32x128xf32>
    %cst_10 = arith.constant 1.000000e+00 : f32
    %16 = vector.broadcast %cst_10 : f32 to vector<32x128xf32>
    %17 = arith.divf %16, %15 : vector<32x128xf32>
    %cst_11 = arith.constant 1.06140542 : f32
    %18 = vector.broadcast %cst_11 : f32 to vector<32x128xf32>
    %19 = arith.mulf %18, %17 : vector<32x128xf32>
    %cst_12 = arith.constant -1.45315206 : f32
    %20 = vector.broadcast %cst_12 : f32 to vector<32x128xf32>
    %21 = arith.addf %19, %20 : vector<32x128xf32>
    %22 = arith.mulf %21, %17 : vector<32x128xf32>
    %cst_13 = arith.constant 1.42141378 : f32
    %23 = vector.broadcast %cst_13 : f32 to vector<32x128xf32>
    %24 = arith.addf %22, %23 : vector<32x128xf32>
    %25 = arith.mulf %24, %17 : vector<32x128xf32>
    %cst_14 = arith.constant -0.284496725 : f32
    %26 = vector.broadcast %cst_14 : f32 to vector<32x128xf32>
    %27 = arith.addf %25, %26 : vector<32x128xf32>
    %28 = arith.mulf %27, %17 : vector<32x128xf32>
    %cst_15 = arith.constant 0.254829586 : f32
    %29 = vector.broadcast %cst_15 : f32 to vector<32x128xf32>
    %30 = arith.addf %28, %29 : vector<32x128xf32>
    %31 = arith.mulf %30, %17 : vector<32x128xf32>
    %cst_16 = arith.constant 0.000000e+00 : f32
    %32 = vector.broadcast %cst_16 : f32 to vector<32x128xf32>
    %33 = arith.subf %32, %11 : vector<32x128xf32>
    %34 = arith.mulf %33, %11 : vector<32x128xf32>
    %35 = math.exp %34 : vector<32x128xf32>
    %36 = arith.mulf %31, %35 : vector<32x128xf32>
    %cst_17 = arith.constant 1.000000e+00 : f32
    %37 = vector.broadcast %cst_17 : f32 to vector<32x128xf32>
    %38 = arith.subf %37, %36 : vector<32x128xf32>
    %cst_18 = arith.constant 0.000000e+00 : f32
    %39 = vector.broadcast %cst_18 : f32 to vector<32x128xf32>
    %40 = arith.cmpf oge, %10, %39 : vector<32x128xf32>
    %cst_19 = arith.constant 0.000000e+00 : f32
    %41 = vector.broadcast %cst_19 : f32 to vector<32x128xf32>
    %42 = arith.subf %41, %38 : vector<32x128xf32>
    %43 = arith.select %40, %38, %42 : vector<32x128xi1>, vector<32x128xf32>
    %cst_20 = arith.constant 1.000000e+00 : f32
    %44 = vector.broadcast %cst_20 : f32 to vector<32x128xf32>
    %45 = arith.addf %44, %43 : vector<32x128xf32>
    %46 = arith.mulf %8, %45 : vector<32x128xf32>
    %c0_21 = arith.constant 0 : index
    %c0_22 = arith.constant 0 : index
    %c0_23 = arith.constant 0 : index
    %47 = vector.load %arg5[%c0_21, %c0_22, %c0_23] : memref<1x32x128xf32, #tpu.memory_space<vmem>>, vector<1x32x128xf32>
    %48 = vector.shape_cast %47 : vector<1x32x128xf32> to vector<32x128xf32>
    %49 = vector.shape_cast %46 : vector<32x128xf32> to vector<1x32x128xf32>
    tpu.vector_store %arg5[%c0_21, %c0_22, %c0_23], %49 {strides = array<i32>} : memref<1x32x128xf32, #tpu.memory_space<vmem>>, vector<1x32x128xf32>,
    return
  }
  func.func @transform_0(%arg0: i32, %arg1: i32) -> (i32, i32, i32) {
    %c0_i32 = arith.constant 0 : i32
    %c0_i32_0 = arith.constant 0 : i32
    return %arg0, %c0_i32, %arg1 : i32, i32, i32
  }
  func.func @transform_1(%arg0: i32, %arg1: i32) -> (i32, i32) {
    %c0_i32 = arith.constant 0 : i32
    %c0_i32_0 = arith.constant 0 : i32
    %c0_i32_1 = arith.constant 0 : i32
    return %c0_i32, %c0_i32_0 : i32, i32
  }
  func.func @transform_2(%arg0: i32, %arg1: i32) -> (i32, i32) {
    %c0_i32 = arith.constant 0 : i32
    %c0_i32_0 = arith.constant 0 : i32
    %c0_i32_1 = arith.constant 0 : i32
    return %c0_i32, %c0_i32_0 : i32, i32
  }
  func.func @transform_3(%arg0: i32, %arg1: i32) -> (i32, i32, i32) {
    %c0_i32 = arith.constant 0 : i32
    %c0_i32_0 = arith.constant 0 : i32
    return %arg0, %c0_i32, %arg1 : i32, i32, i32
  }
}

</mosaic_0001>

<llo_original>
// kernel: tpu_custom_call.1
$region0: #{tpu_custom_call.1}
  #allocation0 [shape = 'u32[]', space=smem, size = 0x4, offset = 0x4, fixed_abs, tag = 'smem constant byte address 0x4 - core index']
  #allocation1 [shape = 'u32[144,128]{1,0:T(1,128)}', space=vmem, size = 0x12000, scoped, tag = 'internal scratch']
  %s0 = inlined_call_operand.vmem [shape: f32[2,4,128], index: 0, kind: input, shape index: {}]
  %s1 = inlined_call_operand.vmem [shape: f32[32,4], index: 1, kind: input, shape index: {}]
  %s2 = inlined_call_operand.vmem [shape: f32[32,1], index: 2, kind: input, shape index: {}]
  %s3 = inlined_call_operand.hbm [shape: f32[2,32,128], index: 3, kind: output, shape index: {}]
  %s4 = sld [smem:[#allocation0]]
  $region45: #{tpu_custom_call.1} parent=0
    _
  %s6 = ssub.s32 1, %s4
  %s7 = scalar_select 0, %s6, %s4
  $region1: #{tpu_custom_call.1} parent=0
    #allocation2 [shape = 'u8[32768]{0}', space=vmem, size = 0x8000, scoped, tag = 'output window, operand 0']
    #allocation3 [shape = 's32[2]{0}', space=sflag, size = 0x8, scoped, tag = 'scoped memory for tpu_custom_call.1']
    %8 = vsyncpa [#allocation3], 0
    %s9 = scalar_lea.sflag [#allocation3], 1
    %10 = vsyncpa %s9, 0
    loop: start=0, step=1, limit=4
    $region2: #{tpu_custom_call.1} parent=1 // loop_pre_header
      _
    $region3: #{tpu_custom_call.1} parent=1 // loop_header
      %s12 = sphi 0, %s16
      %p13 = scmp.ge.s32.totalorder %s12, 4
      %s19 = sphi 0, %s31
      %s20 = sphi 0, %s27
      %s21 = sphi 0, %s19
      %s22 = sphi 0, %s20
      %s23 = sphi 0, %s21
      %s24 = sphi 0, %s22
      %s36 = sphi 0, %s38
      %s39 = sphi 0, %s36
      %s40 = sphi 0, %s39
      %s56 = sphi 0, %s40
      %s60 = sphi 0, %s60
      %s62 = sphi 0, %s60
      %s63 = sphi 0, %s62
      %s77 = sphi 0, %s63
      %s81 = sphi 0, %s81
      %s83 = sphi 0, %s81
      %s84 = sphi 0, %s83
      %s98 = sphi 0, %s84
      %s106 = sphi 0, %s108
      %s109 = sphi 0, %s106
      %s110 = sphi 0, %s109
      %s126 = sphi 0, %s110
    $region4: #{tpu_custom_call.1} parent=1 // loop_header_branch
      %15 = sbr.rel (%p13) target = $region8
    $region5: #{tpu_custom_call.1} parent=1 // loop_body
      %s17 = ssub.s32 %s12, 1
      %s18 = ssub.s32 %s12, 2
      %s25 = sadd.s32 1, %s20
      %p26 = scmp.ge.s32.totalorder %s25, 1
      %s27 = scalar_select %p26, 0, %s25
      %s28 = sadd.s32 1, %s19
      %s29 = scalar_select %p26, %s28, %s19
      %p30 = scmp.ge.s32.totalorder %s29, 2
      %s31 = scalar_select %p30, 0, %s29
      %s32 = ssub.s32 %s19, %s31
      %s33 = ssub.s32 %s20, %s27
      %s34 = sor.u32 %s32, %s33
      %p35 = scmp.eq.s32.totalorder %s34, 0
      %s37 = sadd.s32 %s36, 1
      %s38 = scalar_select %p35, %s36, %s37
      %p41 = pneg %p35
      %p42 = scmp.eq.s32.totalorder %s12, 1
      %p43 = por %p41, %p42
      %p44 = scmp.ne.s32.totalorder %s36, %s39
      %p45 = scmp.eq.s32.totalorder %s12, 0
      %p46 = por %p44, %p45
      %p47 = scmp.ne.s32.totalorder %s36, %s39
      %p48 = scmp.eq.s32.totalorder %s17, 1
      %p49 = por %p47, %p48
      %p50 = scmp.ne.s32.totalorder %s39, %s40
      %p51 = scmp.eq.s32.totalorder %s17, 0
      %p52 = por %p50, %p51
      %p53 = scmp.ne.s32.totalorder %s39, %s40
      %p54 = scmp.eq.s32.totalorder %s18, 1
      %p55 = por %p53, %p54
      %p57 = scmp.ne.s32.totalorder %s40, %s56
      %p58 = scmp.eq.s32.totalorder %s18, 0
      %p59 = por %p57, %p58
      %s61 = sadd.s32 %s60, 1
      %p64 = scmp.eq.s32.totalorder %s12, 1
      %p65 = scmp.ne.s32.totalorder %s60, %s62
      %p66 = scmp.eq.s32.totalorder %s12, 0
      %p67 = por %p65, %p66
      %p68 = scmp.ne.s32.totalorder %s60, %s62
      %p69 = scmp.eq.s32.totalorder %s17, 1
      %p70 = por %p68, %p69
      %p71 = scmp.ne.s32.totalorder %s62, %s63
      %p72 = scmp.eq.s32.totalorder %s17, 0
      %p73 = por %p71, %p72
      %p74 = scmp.ne.s32.totalorder %s62, %s63
      %p75 = scmp.eq.s32.totalorder %s18, 1
      %p76 = por %p74, %p75
      %p78 = scmp.ne.s32.totalorder %s63, %s77
      %p79 = scmp.eq.s32.totalorder %s18, 0
      %p80 = por %p78, %p79
      %s82 = sadd.s32 %s81, 1
      %p85 = scmp.eq.s32.totalorder %s12, 1
      %p86 = scmp.ne.s32.totalorder %s81, %s83
      %p87 = scmp.eq.s32.totalorder %s12, 0
      %p88 = por %p86, %p87
      %p89 = scmp.ne.s32.totalorder %s81, %s83
      %p90 = scmp.eq.s32.totalorder %s17, 1
      %p91 = por %p89, %p90
      %p92 = scmp.ne.s32.totalorder %s83, %s84
      %p93 = scmp.eq.s32.totalorder %s17, 0
      %p94 = por %p92, %p93
      %p95 = scmp.ne.s32.totalorder %s83, %s84
      %p96 = scmp.eq.s32.totalorder %s18, 1
      %p97 = por %p95, %p96
      %p99 = scmp.ne.s32.totalorder %s84, %s98
      %p100 = scmp.eq.s32.totalorder %s18, 0
      %p101 = por %p99, %p100
      %s102 = ssub.s32 %s19, %s31
      %s103 = ssub.s32 %s20, %s27
      %s104 = sor.u32 %s102, %s103
      %p105 = scmp.eq.s32.totalorder %s104, 0
      %s107 = sadd.s32 %s106, 1
      %s108 = scalar_select %p105, %s106, %s107
      %p111 = pneg %p105
      %p112 = scmp.eq.s32.totalorder %s12, 1
      %p113 = por %p111, %p112
      %p114 = scmp.ne.s32.totalorder %s106, %s109
      %p115 = scmp.eq.s32.totalorder %s12, 0
      %p116 = por %p114, %p115
      %p117 = scmp.ne.s32.totalorder %s106, %s109
      %p118 = scmp.eq.s32.totalorder %s17, 1
      %p119 = por %p117, %p118
      %p120 = scmp.ne.s32.totalorder %s109, %s110
      %p121 = scmp.eq.s32.totalorder %s17, 0
      %p122 = por %p120, %p121
      %p123 = scmp.ne.s32.totalorder %s109, %s110
      %p124 = scmp.eq.s32.totalorder %s18, 1
      %p125 = por %p123, %p124
      %p127 = scmp.ne.s32.totalorder %s110, %s126
      %p128 = scmp.eq.s32.totalorder %s18, 0
      %p129 = por %p127, %p128
      %p130 = scmp.le.s32.totalorder 1, %s12
      %p131 = scmp.lt.s32.totalorder %s12, 3
      %p132 = pnand %p130, %p131
      %p133 = pneg %p132
      // Predicated region
      $region9: #{tpu_custom_call.1} parent=5 // pred_check
        _
      $region10: #{tpu_custom_call.1} parent=5 // pred_check_branch
        %135 = sbr.rel (%p132) target = $region12
      $region11: #{tpu_custom_call.1} parent=5 // pred_region
        %s136 = ssub.s32 %s12, 1
        // Predicated region
        $region13: #{tpu_custom_call.1} parent=11 // pred_check
          %p137 = pneg %p73
        $region14: #{tpu_custom_call.1} parent=11 // pred_check_branch
          %139 = sbr.rel (%p137) target = $region16
        $region15: #{tpu_custom_call.1} parent=11 // pred_region
          _
        $region16: #{tpu_custom_call.1} parent=11 // pred_fallthru
          _
        // Predicated region
        $region17: #{tpu_custom_call.1} parent=11 // pred_check
          %p140 = pneg %p94
        $region18: #{tpu_custom_call.1} parent=11 // pred_check_branch
          %142 = sbr.rel (%p140) target = $region20
        $region19: #{tpu_custom_call.1} parent=11 // pred_region
          _
        $region20: #{tpu_custom_call.1} parent=11 // pred_fallthru
          _
      $region12: #{tpu_custom_call.1} parent=5 // pred_fallthru
        _
      %p143 = scmp.lt.s32.totalorder %s12, 2
      // Predicated region
      $region21: #{tpu_custom_call.1} parent=5 // pred_check
        %p144 = pneg %p143
      $region22: #{tpu_custom_call.1} parent=5 // pred_check_branch
        %146 = sbr.rel (%p144) target = $region24
      $region23: #{tpu_custom_call.1} parent=5 // pred_region
        // Predicated region
        $region25: #{tpu_custom_call.1} parent=23 // pred_check
          %p147 = pneg %p46
        $region26: #{tpu_custom_call.1} parent=23 // pred_check_branch
          %149 = sbr.rel (%p147) target = $region28
        $region27: #{tpu_custom_call.1} parent=23 // pred_region
          %p150 = scmp.lt.s32.totalorder %s19, 1
          %s151 = scalar_select %p150, %s19, 1
          %p152 = scmp.lt.s32.totalorder %s20, 0
          %s153 = scalar_select %p152, %s20, 0
          %s154 = sadd.s32 %s153, %s151
          %s155 = smul.addr %s154, 4
          %s156 = scalar_lea.vmem %s0, %s155
        $region28: #{tpu_custom_call.1} parent=23 // pred_fallthru
          _
      $region24: #{tpu_custom_call.1} parent=5 // pred_fallthru
        _
      %p157 = scmp.le.s32.totalorder 1, %s12
      %p158 = scmp.lt.s32.totalorder %s12, 3
      %p159 = pnand %p157, %p158
      %p160 = pneg %p159
      // Predicated region
      $region29: #{tpu_custom_call.1} parent=5 // pred_check
        _
      $region30: #{tpu_custom_call.1} parent=5 // pred_check_branch
        %162 = sbr.rel (%p159) target = $region32
      $region31: #{tpu_custom_call.1} parent=5 // pred_region
        %s163 = ssub.s32 %s12, 1
        %p164 = scmp.lt.s32.totalorder %s21, 1
        %s165 = scalar_select %p164, %s21, 1
        %p166 = scmp.lt.s32.totalorder %s22, 0
        %s167 = scalar_select %p166, %s22, 0
        %s168 = sadd.s32 %s167, %s165
        %s169 = smul.addr %s168, 4
        %s170 = scalar_lea.vmem %s0, %s169
        %p171 = pneg %p52
        %p172 = pneg %p49
        %p173 = pneg %p73
        %p174 = pneg %p70
        %p175 = pneg %p94
        %p176 = pneg %p91
        %p177 = pneg %p122
        %p178 = pneg %p119
        %s179 = sand.u32 %s109, 1
        %s180 = scalar_lea.sflag [#allocation3], %s179
        %s181 = sand.u32 %s109, 1
        %s182 = smul.addr %s181, 32
        %s183 = scalar_lea.vmem [#allocation2], %s182
        %p184 = scmp.lt.s32.totalorder %s21, 1
        %s185 = scalar_select %p184, %s21, 1
        %p186 = scmp.lt.s32.totalorder %s22, 0
        %s187 = scalar_select %p186, %s22, 0
        %s188 = sadd.s32 %s187, %s185
        %s189 = smul.addr %s188, 4
        %s190 = scalar_lea.vmem %s0, %s189
        %v191 = vld [vmem:[%s1] sm:$0xff]
        %v192 = vld [vmem:[%s1 + $0x8] sm:$0xff]
        %v193 = vld [vmem:[%s1 + $0x10] sm:$0xff]
        %v194 = vld [vmem:[%s1 + $0x18] sm:$0xff]
        %v195 = vld [vmem:[%s190] sm:$0xf]
        %v196 = vld [vmem:[%s2] sm:$0xff]
        %v197 = vld [vmem:[%s2 + $0x8] sm:$0xff]
        %v198 = vld [vmem:[%s2 + $0x10] sm:$0xff]
        %v199 = vld [vmem:[%s2 + $0x18] sm:$0xff]
        %201 = vset.pattern.permute.xlu0 0
        %202 = vperm.xlu0 %201, %v196
        %v203 = vpop.permute.xlu0 %202
        %206 = vset.pattern.permute.xlu0 0
        %207 = vperm.xlu0 %206, %v197
        %v208 = vpop.permute.xlu0 %207
        %211 = vset.pattern.permute.xlu0 0
        %212 = vperm.xlu0 %211, %v198
        %v213 = vpop.permute.xlu0 %212
        %216 = vset.pattern.permute.xlu0 0
        %217 = vperm.xlu0 %216, %v199
        %v218 = vpop.permute.xlu0 %217
        %vm220 = vcmask 31744
        %v222 = vsel %vm220, %v191, 0
        %v225 = vsel %vm220, %v192, 0
        %v228 = vsel %vm220, %v193, 0
        %v231 = vsel %vm220, %v194, 0
        %vm233 = vcmask 1043456
        %v235 = vsel %vm233, %v195, 0
        %237 = vmatprep.subr.mxu0 0.0
        %238 = vmatpush1.msra.mxu0 %v235
        %239 = vmatprep.subr.mxu0 0.0
        %240 = vmatpush1.msra.mxu0 0.0
        %241 = vmatprep.subr.mxu0 0.0
        %242 = vmatpush1.msra.mxu0 0.0
        %243 = vmatprep.subr.mxu0 0.0
        %244 = vmatpush1.msra.mxu0 0.0
        %245 = vmatprep.subr.mxu0 0.0
        %246 = vmatpush1.msra.mxu0 0.0
        %247 = vmatprep.subr.mxu0 0.0
        %248 = vmatpush1.msra.mxu0 0.0
        %249 = vmatprep.subr.mxu0 0.0
        %250 = vmatpush1.msra.mxu0 0.0
        %251 = vmatprep.subr.mxu0 0.0
        %252 = vmatpush1.msra.mxu0 0.0
        %253 = vmatprep.subr.mxu0 0.0
        %254 = vmatpush1.msra.mxu0 0.0
        %255 = vmatprep.subr.mxu0 0.0
        %256 = vmatpush1.msra.mxu0 0.0
        %257 = vmatprep.subr.mxu0 0.0
        %258 = vmatpush1.msra.mxu0 0.0
        %259 = vmatprep.subr.mxu0 0.0
        %260 = vmatpush1.msra.mxu0 0.0
        %261 = vmatprep.subr.mxu0 0.0
        %262 = vmatpush1.msra.mxu0 0.0
        %263 = vmatprep.subr.mxu0 0.0
        %264 = vmatpush1.msra.mxu0 0.0
        %265 = vmatprep.subr.mxu0 0.0
        %266 = vmatpush1.msra.mxu0 0.0
        %267 = vmatprep.subr.mxu0 0.0
        %268 = vmatpush1.msra.mxu0 0.0
        %269 = vmatprep.subr.mxu0 0.0
        %270 = vmatpush1.msra.mxu0 0.0
        %271 = vmatprep.subr.mxu0 0.0
        %272 = vmatpush1.msra.mxu0 0.0
        %273 = vmatprep.subr.mxu0 0.0
        %274 = vmatpush1.msra.mxu0 0.0
        %275 = vmatprep.subr.mxu0 0.0
        %276 = vmatpush1.msra.mxu0 0.0
        %277 = vmatprep.subr.mxu0 0.0
        %278 = vmatpush1.msra.mxu0 0.0
        %279 = vmatprep.subr.mxu0 0.0
        %280 = vmatpush1.msra.mxu0 0.0
        %281 = vmatprep.subr.mxu0 0.0
        %282 = vmatpush1.msra.mxu0 0.0
        %283 = vmatprep.subr.mxu0 0.0
        %284 = vmatpush1.msra.mxu0 0.0
        %285 = vmatprep.subr.mxu0 0.0
        %286 = vmatpush1.msra.mxu0 0.0
        %287 = vmatprep.subr.mxu0 0.0
        %288 = vmatpush1.msra.mxu0 0.0
        %289 = vmatprep.subr.mxu0 0.0
        %290 = vmatpush1.msra.mxu0 0.0
        %291 = vmatprep.subr.mxu0 0.0
        %292 = vmatpush1.msra.mxu0 0.0
        %293 = vmatprep.subr.mxu0 0.0
        %294 = vmatpush1.msra.mxu0 0.0
        %295 = vmatprep.subr.mxu0 0.0
        %296 = vmatpush1.msra.mxu0 0.0
        %297 = vmatprep.subr.mxu0 0.0
        %298 = vmatpush1.msra.mxu0 0.0
        %299 = vmatprep.subr.mxu0 0.0
        %300 = vmatpush1.msra.mxu0 0.0
        %301 = vmatprep.mubr.f32.mxu0 0.0
        %302 = vmatmul.mubr.f32.gmra.mrb[0].mxu0 %v222
        %v303 = vpop.f32.mrb[0].mxu0
        %v304 = vadd.f32 %v203, %v303
        %v305 = vpop.f32.mrb[0].mxu0
        %306 = vmatprep.mubr.f32.mxu0 0.0
        %307 = vmatmul.mubr.f32.gmra.mrb[0].mxu0 %v225
        %v308 = vpop.f32.mrb[0].mxu0
        %v309 = vadd.f32 %v208, %v308
        %v310 = vpop.f32.mrb[0].mxu0
        %311 = vmatprep.mubr.f32.mxu0 0.0
        %312 = vmatmul.mubr.f32.gmra.mrb[0].mxu0 %v228
        %v313 = vpop.f32.mrb[0].mxu0
        %v314 = vadd.f32 %v213, %v313
        %v315 = vpop.f32.mrb[0].mxu0
        %316 = vmatprep.mubr.f32.mxu0 0.0
        %317 = vmatmul.mubr.f32.gmra.mrb[0].mxu0 %v231
        %v318 = vpop.f32.mrb[0].mxu0
        %v319 = vadd.f32 %v218, %v318
        %v320 = vpop.f32.mrb[0].mxu0
        %321 = vdwg.mxu0
        %v322 = vmul.f32 %v304, 0.5
        %v323 = vmul.f32 %v309, 0.5
        %v324 = vmul.f32 %v314, 0.5
        %v325 = vmul.f32 %v319, 0.5
        %v326 = vmul.f32 %v304, 0.70710677
        %v327 = vmul.f32 %v309, 0.70710677
        %v328 = vmul.f32 %v314, 0.70710677
        %v329 = vmul.f32 %v319, 0.70710677
        %v330 = vand.u32 2147483647, %v326
        %v331 = vand.u32 2147483647, %v327
        %v332 = vand.u32 2147483647, %v328
        %v333 = vand.u32 2147483647, %v329
        %v334 = vmul.f32 %v330, 0.3275911
        %v335 = vmul.f32 %v331, 0.3275911
        %v336 = vmul.f32 %v332, 0.3275911
        %v337 = vmul.f32 %v333, 0.3275911
        %v338 = vadd.f32 %v334, 1.0
        %v339 = vadd.f32 %v335, 1.0
        %v340 = vadd.f32 %v336, 1.0
        %v341 = vadd.f32 %v337, 1.0
        %v342 = vrcp.pop %v338
        %v343 = vmul.f32 1.0, %v342
        %v344 = vrcp.pop %v339
        %v345 = vmul.f32 1.0, %v344
        %v346 = vrcp.pop %v340
        %v347 = vmul.f32 1.0, %v346
        %v348 = vrcp.pop %v341
        %v349 = vmul.f32 1.0, %v348
        %v350 = vmul.f32 %v343, 1.0614054
        %v351 = vmul.f32 %v345, 1.0614054
        %v352 = vmul.f32 %v347, 1.0614054
        %v353 = vmul.f32 %v349, 1.0614054
        %v354 = vadd.f32 %v350, -1.4531521
        %v355 = vadd.f32 %v351, -1.4531521
        %v356 = vadd.f32 %v352, -1.4531521
        %v357 = vadd.f32 %v353, -1.4531521
        %v358 = vmul.f32 %v354, %v343
        %v359 = vmul.f32 %v355, %v345
        %v360 = vmul.f32 %v356, %v347
        %v361 = vmul.f32 %v357, %v349
        %v362 = vadd.f32 %v358, 1.4214138
        %v363 = vadd.f32 %v359, 1.4214138
        %v364 = vadd.f32 %v360, 1.4214138
        %v365 = vadd.f32 %v361, 1.4214138
        %v366 = vmul.f32 %v362, %v343
        %v367 = vmul.f32 %v363, %v345
        %v368 = vmul.f32 %v364, %v347
        %v369 = vmul.f32 %v365, %v349
        %v370 = vadd.f32 %v366, -0.28449672
        %v371 = vadd.f32 %v367, -0.28449672
        %v372 = vadd.f32 %v368, -0.28449672
        %v373 = vadd.f32 %v369, -0.28449672
        %v374 = vmul.f32 %v370, %v343
        %v375 = vmul.f32 %v371, %v345
        %v376 = vmul.f32 %v372, %v347
        %v377 = vmul.f32 %v373, %v349
        %v378 = vadd.f32 %v374, 0.2548296
        %v379 = vadd.f32 %v375, 0.2548296
        %v380 = vadd.f32 %v376, 0.2548296
        %v381 = vadd.f32 %v377, 0.2548296
        %v382 = vmul.f32 %v378, %v343
        %v383 = vmul.f32 %v379, %v345
        %v384 = vmul.f32 %v380, %v347
        %v385 = vmul.f32 %v381, %v349
        %v386 = vsub.f32 0.0, %v330
        %v387 = vsub.f32 0.0, %v331
        %v388 = vsub.f32 0.0, %v332
        %v389 = vsub.f32 0.0, %v333
        %v390 = vmul.f32 %v386, %v330
        %v391 = vmul.f32 %v387, %v331
        %v392 = vmul.f32 %v388, %v332
        %v393 = vmul.f32 %v389, %v333
        %v394 = vmul.f32 %v390, 1.442695
        %v395 = vpow.pop %v394
        %v396 = vmul.f32 %v391, 1.442695
        %v397 = vpow.pop %v396
        %v398 = vmul.f32 %v392, 1.442695
        %v399 = vpow.pop %v398
        %v400 = vmul.f32 %v393, 1.442695
        %v401 = vpow.pop %v400
        %v402 = vmul.f32 %v382, %v395
        %v403 = vmul.f32 %v383, %v397
        %v404 = vmul.f32 %v384, %v399
        %v405 = vmul.f32 %v385, %v401
        %v406 = vsub.f32 1.0, %v402
        %v407 = vsub.f32 1.0, %v403
        %v408 = vsub.f32 1.0, %v404
        %v409 = vsub.f32 1.0, %v405
        %vm410 = vcmp.ge.f32.partialorder %v326, 0.0
        %vm411 = vcmp.ge.f32.partialorder %v327, 0.0
        %vm412 = vcmp.ge.f32.partialorder %v328, 0.0
        %vm413 = vcmp.ge.f32.partialorder %v329, 0.0
        %v414 = vsub.f32 0.0, %v406
        %v415 = vsub.f32 0.0, %v407
        %v416 = vsub.f32 0.0, %v408
        %v417 = vsub.f32 0.0, %v409
        %v418 = vsel %vm410, %v406, %v414
        %v419 = vsel %vm411, %v407, %v415
        %v420 = vsel %vm412, %v408, %v416
        %v421 = vsel %vm413, %v409, %v417
        %v422 = vadd.f32 %v418, 1.0
        %v423 = vadd.f32 %v419, 1.0
        %v424 = vadd.f32 %v420, 1.0
        %v425 = vadd.f32 %v421, 1.0
        %v426 = vmul.f32 %v322, %v422
        %v427 = vmul.f32 %v323, %v423
        %v428 = vmul.f32 %v324, %v424
        %v429 = vmul.f32 %v325, %v425
        %430 = vst [vmem:[%s183] sm:$0xff] %v426
        %431 = vst [vmem:[%s183 + $0x8] sm:$0xff] %v427
        %432 = vst [vmem:[%s183 + $0x10] sm:$0xff] %v428
        %433 = vst [vmem:[%s183 + $0x18] sm:$0xff] %v429
        %s434 = sand.u32 %s109, 1
        %s435 = scalar_lea.sflag [#allocation3], %s434
        %s436 = sand.u32 %s109, 1
        %s437 = smul.addr %s436, 32
        %s438 = scalar_lea.vmem [#allocation2], %s437
        // Predicated region
        $region33: #{tpu_custom_call.1} parent=31 // pred_check
          %p439 = pneg %p119
        $region34: #{tpu_custom_call.1} parent=31 // pred_check_branch
          %441 = sbr.rel (%p439) target = $region36
        $region35: #{tpu_custom_call.1} parent=31 // pred_region
          %s443 = ssub.s32 512, 512
          %444 = vsyncadd %s435, %s443
          %s445 = smul.addr %s21, 4
          %s446 = sadd.s32 %s22, %s445
          %s447 = smul.addr %s446, 128
          %s448 = scalar_lea.hbm %s3, %s447
          %s449 = sshll.u32 %s438, 4
          %s450 = int_to_ptr.vmem [resolvable:$true] %s449
          %455 = dma.vmem_to_hbm [thread:$0]  %s450, 512, %s448, %s435, 128, 128, 8
        $region36: #{tpu_custom_call.1} parent=31 // pred_fallthru
          _
      $region32: #{tpu_custom_call.1} parent=5 // pred_fallthru
        _
      %p456 = scmp.le.s32.totalorder 2, %s12
      // Predicated region
      $region37: #{tpu_custom_call.1} parent=5 // pred_check
        %p457 = pneg %p456
      $region38: #{tpu_custom_call.1} parent=5 // pred_check_branch
        %459 = sbr.rel (%p457) target = $region40
      $region39: #{tpu_custom_call.1} parent=5 // pred_region
        %s460 = ssub.s32 %s12, 2
        // Predicated region
        $region41: #{tpu_custom_call.1} parent=39 // pred_check
          %p461 = pneg %p125
        $region42: #{tpu_custom_call.1} parent=39 // pred_check_branch
          %463 = sbr.rel (%p461) target = $region44
        $region43: #{tpu_custom_call.1} parent=39 // pred_region
          %s464 = sand.u32 %s110, 1
          %s465 = scalar_lea.sflag [#allocation3], %s464
          %s466 = sand.u32 %s110, 1
          %s467 = smul.addr %s466, 32
          %s468 = scalar_lea.vmem [#allocation2], %s467
          %469 = dma.done %s465, 512
        $region44: #{tpu_custom_call.1} parent=39 // pred_fallthru
          _
      $region40: #{tpu_custom_call.1} parent=5 // pred_fallthru
        _
    $region6: #{tpu_custom_call.1} parent=1 // loop_footer
      %s16 = sadd.s32 1, %s12
    $region7: #{tpu_custom_call.1} parent=1 // loop_footer_branch
      %11 = sbr.rel target = $region3
    $region8: #{tpu_custom_call.1} parent=1 // loop_exit
      _
    %470 = vsyncpa [#allocation3], 1
    %s471 = scalar_lea.sflag [#allocation3], 1
    %472 = vsyncpa %s471, 1

</llo_original>
